<compile_context>
chip_gen: v7x
topology: tpu7x:2x2x1
jax: 0.10.0
libtpu: 0.0.40
codegen_flags: <defaults>
</compile_context>

<pallas_src>
import jax
import jax.numpy as jnp
from jax.experimental import pallas as pl
from jax.experimental.pallas import tpu as pltpu


def bert_output_kernel(x_ref, w_ref, p_ref, res_ref, o_ref, *, eps):
    # x_ref:   [TM, I]  flattened hidden_states tile (pipelined)
    # w_ref:   [I,  H]  dense weight, pre-transposed to (in, out), grid-invariant
    # p_ref:   [3,  H]  f32 packed (bias, gamma, beta), grid-invariant
    # res_ref: [TM, H]  residual (input_tensor) tile (pipelined)
    # o_ref:   [TM, H]
    w = w_ref[...]
    x = x_ref[...]
    if x.dtype != w.dtype:            # bf16 fast path: cast activations to the
        x = x.astype(w.dtype)         # weight's (MXU-native) dtype in-VMEM.

    # Native (M,K)x(K,N) matmul on the MXU with f32 accumulation.
    h = jnp.dot(x, w, preferred_element_type=jnp.float32)

    p = p_ref[...]                    # [3, H] f32
    bias, gamma, beta = p[0:1, :], p[1:2, :], p[2:3, :]

    # TODO(synk): dropout omitted (inference / eval mode, p=0 path only).

    # Residual add in f32 with the bias folded in.
    y = h + (res_ref[...].astype(jnp.float32) + bias)

    # One-pass LayerNorm statistics over the hidden (lane) axis, all f32.
    mean = jnp.mean(y, axis=-1, keepdims=True)
    mean_sq = jnp.mean(y * y, axis=-1, keepdims=True)
    var = mean_sq - mean * mean
    inv = jax.lax.rsqrt(var + eps)
    o_ref[...] = ((y - mean) * (inv * gamma) + beta).astype(o_ref.dtype)


def _vmem_capacity_bytes():
    """Physical VMEM per TensorCore; conservative 64 MiB (v7x) fallback."""
    try:
        info = pltpu.get_tpu_info()
        for attr in ("vmem_capacity_bytes", "vmem_bytes", "vmem_size_bytes"):
            v = getattr(info, attr, None)
            if v:
                return int(v)
    except Exception:
        pass
    return 64 * 1024 * 1024


def custom_bert_output(hidden_states, input_tensor, w, b, gamma, beta,
                       eps=1e-12, block_m=None, matmul_dtype=None):
    """hidden_states: [B, S, I], input_tensor: [B, S, H]; w: [H, I] (torch Linear layout).

    matmul_dtype: optional dtype (e.g. jnp.bfloat16) for the GEMM operands.
    Accumulation and LayerNorm statistics are always f32.
    """
    B, S, I = hidden_states.shape
    H = input_tensor.shape[-1]
    M = B * S

    x2 = hidden_states.reshape(M, I)
    r2 = input_tensor.reshape(M, H)

    # One-time HBM transpose to (in, out) layout (hoisted/cached under jit for
    # constant weights) -- far cheaper than a per-grid-step XLU transpose.
    w_t = jnp.transpose(w)
    if matmul_dtype is not None:
        w_t = w_t.astype(matmul_dtype)    # also halves weight DMA when bf16

    # Pack bias / gamma / beta into a single tiny f32 [3, H] grid-invariant array.
    params = jnp.stack(
        [b.astype(jnp.float32), gamma.astype(jnp.float32), beta.astype(jnp.float32)],
        axis=0,
    )

    in_isz = jnp.dtype(x2.dtype).itemsize
    out_isz = in_isz
    w_isz = jnp.dtype(w_t.dtype).itemsize

    # Per-generation VMEM budget (leave headroom for Mosaic internal scratch).
    vmem_cap = _vmem_capacity_bytes()
    headroom = (12 << 20) if vmem_cap <= (80 << 20) else (16 << 20)
    budget = max(vmem_cap - headroom, 24 << 20)

    # Single-buffered weight + packed params are resident across the whole grid.
    fixed = I * H * w_isz + 3 * H * 4
    # Per-row cost: double-buffered x / residual / output tiles plus ~3 f32
    # [TM, H] LayerNorm intermediates (counted even for bf16 inputs).
    per_row = 2 * I * in_isz + 2 * H * in_isz + 2 * H * out_isz + 3 * H * 4

    sub = 16 if jnp.dtype(x2.dtype) == jnp.bfloat16 else 8
    if block_m is None:
        # Bigger tiles on 128-MiB v5e/v6e (HBM roofline + per-step overhead),
        # more conservative on 64-MiB v7x.
        cap = 1024 if vmem_cap >= (100 << 20) else (512 if in_isz <= 2 else 384)
        tm = (budget - fixed) // per_row
        tm = int(min(max(tm, sub), cap, M))
    else:
        tm = min(block_m, M)
    tm = max(sub, (tm // sub) * sub)
    grid_m = pl.cdiv(M, tm)
    # NOTE: on v7x (2 TCs/chip) a grid of >= 2 (ideally even) steps keeps both
    # cores busy along the "parallel" axis; the weight is replicated per core.

    est = fixed + per_row * tm + (2 << 20)
    vmem_limit = int(min(max(budget, est), vmem_cap - (4 << 20)))

    kernel = lambda *refs: bert_output_kernel(*refs, eps=eps)

    out2 = pl.pallas_call(
        kernel,
        out_shape=jax.ShapeDtypeStruct((M, H), hidden_states.dtype),
        grid=(grid_m,),
        in_specs=[
            # x tile: pipelined along the row grid.
            pl.BlockSpec((tm, I), lambda i: (i, 0)),
            # weight: grid-invariant -> single-buffered.
            pl.BlockSpec((I, H), lambda i: (0, 0), pipeline_mode=pl.Buffered(1)),
            # packed bias/gamma/beta: grid-invariant -> single-buffered.
            pl.BlockSpec((3, H), lambda i: (0, 0), pipeline_mode=pl.Buffered(1)),
            # residual tile: pipelined along the row grid.
            pl.BlockSpec((tm, H), lambda i: (i, 0)),
        ],
        out_specs=pl.BlockSpec((tm, H), lambda i: (i, 0)),   # lane-dense output
        compiler_params=pltpu.CompilerParams(
            dimension_semantics=("parallel",),
            vmem_limit_bytes=vmem_limit,
        ),
    )(x2, w_t, params, r2)

    return out2.reshape(B, S, H)


def _reference(hidden_states, input_tensor, w, b, gamma, beta, eps):
    h = hidden_states.astype(jnp.float32) @ w.astype(jnp.float32).T + b.astype(jnp.float32)
    y = h + input_tensor.astype(jnp.float32)
    mu = y.mean(-1, keepdims=True)
    var = ((y - mu) ** 2).mean(-1, keepdims=True)
    return (y - mu) / jnp.sqrt(var + eps) * gamma.astype(jnp.float32) + beta.astype(jnp.float32)


if __name__ == "__main__":
    # Small BERT-ish config.
    B, S = 2, 8
    hidden_size = 128
    intermediate_size = 256
    eps = 1e-12

    key = jax.random.PRNGKey(0)
    k1, k2, k3, k4 = jax.random.split(key, 4)

    # Deterministic synthetic parameters (nn.Linear / nn.LayerNorm shapes).
    w = jax.random.normal(k1, (hidden_size, intermediate_size), jnp.float32) * 0.02
    b = jax.random.normal(k2, (hidden_size,), jnp.float32) * 0.02
    gamma = jnp.ones((hidden_size,), jnp.float32)
    beta = jnp.zeros((hidden_size,), jnp.float32)

    hidden_states = jax.random.normal(k3, (B, S, intermediate_size), jnp.float32)
    input_tensor = jax.random.normal(k4, (B, S, hidden_size), jnp.float32)

    ref = _reference(hidden_states, input_tensor, w, b, gamma, beta, eps)

    # 1) f32 path, auto tile (single grid step at this toy size), exact semantics.
    out = custom_bert_output(hidden_states, input_tensor, w, b, gamma, beta, eps)
    out = jax.block_until_ready(out)
    assert jnp.allclose(out, ref, atol=1e-4, rtol=1e-4), "f32 mismatch vs reference"

    # 2) f32 path with a small row tile -> multi-step grid, exercises pipelining.
    out_t = custom_bert_output(hidden_states, input_tensor, w, b, gamma, beta, eps,
                               block_m=8)
    out_t = jax.block_until_ready(out_t)
    assert jnp.allclose(out_t, ref, atol=1e-4, rtol=1e-4), "tiled f32 mismatch vs reference"

    # 3) f32 inputs, bf16 MXU operands (fast path on all gens; f32 acc + f32 LN stats).
    out_mx = custom_bert_output(hidden_states, input_tensor, w, b, gamma, beta, eps,
                                matmul_dtype=jnp.bfloat16)
    out_mx = jax.block_until_ready(out_mx)
    assert jnp.allclose(out_mx, ref, atol=5e-2), "bf16-matmul mismatch vs reference"

    # 4) bf16 end-to-end (bf16 operands, f32 accumulation + f32 LayerNorm stats).
    out_bf16 = custom_bert_output(
        hidden_states.astype(jnp.bfloat16), input_tensor.astype(jnp.bfloat16),
        w.astype(jnp.bfloat16), b.astype(jnp.bfloat16),
        gamma.astype(jnp.bfloat16), beta.astype(jnp.bfloat16), eps)
    out_bf16 = jax.block_until_ready(out_bf16)
    assert jnp.allclose(out_bf16.astype(jnp.float32), ref, atol=5e-2), \
        "bf16 mismatch vs reference"

    print("KERNEL_OK")
</pallas_src>

<mosaic_0001>
module attributes {stable_mosaic.version = 11 : i64} {
  func.func @_lambda_(%arg0: i32, %arg1: memref<16x256xf32, #tpu.memory_space<vmem>>, %arg2: memref<256x128xf32, #tpu.memory_space<vmem>>, %arg3: memref<3x128xf32, #tpu.memory_space<vmem>>, %arg4: memref<16x128xf32, #tpu.memory_space<vmem>>, %arg5: memref<16x128xf32, #tpu.memory_space<vmem>>) attributes {dimension_semantics = [#tpu.dimension_semantics<parallel>], iteration_bounds = array<i64: 1>, scalar_prefetch = 0 : i64, scratch_operands = 0 : i64, tpu.core_type = #tpu.core_type<tc>, window_params = [{transform_indices = @transform_0, window_bounds = array<i64: 16, 256>}, {pipeline_mode = #tpu.pipeline_mode<synchronous>, transform_indices = @transform_1, window_bounds = array<i64: 256, 128>}, {pipeline_mode = #tpu.pipeline_mode<synchronous>, transform_indices = @transform_2, window_bounds = array<i64: 3, 128>}, {transform_indices = @transform_3, window_bounds = array<i64: 16, 128>}, {transform_indices = @transform_4, window_bounds = array<i64: 16, 128>}]} {
    %c0 = arith.constant 0 : index
    %c0_0 = arith.constant 0 : index
    %0 = vector.load %arg2[%c0, %c0_0] : memref<256x128xf32, #tpu.memory_space<vmem>>, vector<256x128xf32>
    %c0_1 = arith.constant 0 : index
    %c0_2 = arith.constant 0 : index
    %1 = vector.load %arg1[%c0_1, %c0_2] : memref<16x256xf32, #tpu.memory_space<vmem>>, vector<16x256xf32>
    %cst = arith.constant dense<0.000000e+00> : vector<16x128xf32>
    %2 = tpu.matmul %1, %0, %cst {dimension_numbers = #tpu.dot_dimension_numbers<[1], [0], [0], [1], [0, 0, 1, 1], [], []>} : vector<16x256xf32>, vector<256x128xf32>, vector<16x128xf32> -> vector<16x128xf32>
    %c0_3 = arith.constant 0 : index
    %c0_4 = arith.constant 0 : index
    %3 = vector.load %arg3[%c0_3, %c0_4] : memref<3x128xf32, #tpu.memory_space<vmem>>, vector<3x128xf32>
    %4 = vector.extract_strided_slice %3 {offsets = [0, 0], sizes = [1, 128], strides = [1, 1]} : vector<3x128xf32> to vector<1x128xf32>
    %5 = vector.extract_strided_slice %3 {offsets = [1, 0], sizes = [1, 128], strides = [1, 1]} : vector<3x128xf32> to vector<1x128xf32>
    %6 = vector.extract_strided_slice %3 {offsets = [2, 0], sizes = [1, 128], strides = [1, 1]} : vector<3x128xf32> to vector<1x128xf32>
    %c0_5 = arith.constant 0 : index
    %c0_6 = arith.constant 0 : index
    %7 = vector.load %arg4[%c0_5, %c0_6] : memref<16x128xf32, #tpu.memory_space<vmem>>, vector<16x128xf32>
    %8 = vector.broadcast %4 : vector<1x128xf32> to vector<16x128xf32>
    %9 = arith.addf %7, %8 : vector<16x128xf32>
    %10 = arith.addf %2, %9 : vector<16x128xf32>
    %cst_7 = arith.constant dense<0.000000e+00> : vector<16xf32>
    %11 = vector.multi_reduction <add>, %10, %cst_7 [1] : vector<16x128xf32> to vector<16xf32>
    %12 = vector.shape_cast %11 : vector<16xf32> to vector<16x1xf32>
    %cst_8 = arith.constant 1.280000e+02 : f32
    %13 = vector.broadcast %cst_8 : f32 to vector<16x1xf32>
    %14 = arith.divf %12, %13 : vector<16x1xf32>
    %15 = arith.mulf %10, %10 : vector<16x128xf32>
    %cst_9 = arith.constant dense<0.000000e+00> : vector<16xf32>
    %16 = vector.multi_reduction <add>, %15, %cst_9 [1] : vector<16x128xf32> to vector<16xf32>
    %17 = vector.shape_cast %16 : vector<16xf32> to vector<16x1xf32>
    %cst_10 = arith.constant 1.280000e+02 : f32
    %18 = vector.broadcast %cst_10 : f32 to vector<16x1xf32>
    %19 = arith.divf %17, %18 : vector<16x1xf32>
    %20 = arith.mulf %14, %14 : vector<16x1xf32>
    %21 = arith.subf %19, %20 : vector<16x1xf32>
    %cst_11 = arith.constant 9.99999996E-13 : f32
    %22 = vector.broadcast %cst_11 : f32 to vector<16x1xf32>
    %23 = arith.addf %21, %22 : vector<16x1xf32>
    %24 = math.rsqrt %23 : vector<16x1xf32>
    %25 = vector.broadcast %14 : vector<16x1xf32> to vector<16x128xf32>
    %26 = arith.subf %10, %25 : vector<16x128xf32>
    %27 = vector.broadcast %24 : vector<16x1xf32> to vector<16x128xf32>
    %28 = vector.broadcast %5 : vector<1x128xf32> to vector<16x128xf32>
    %29 = arith.mulf %27, %28 : vector<16x128xf32>
    %30 = arith.mulf %26, %29 : vector<16x128xf32>
    %31 = vector.broadcast %6 : vector<1x128xf32> to vector<16x128xf32>
    %32 = arith.addf %30, %31 : vector<16x128xf32>
    %c0_12 = arith.constant 0 : index
    %c0_13 = arith.constant 0 : index
    %33 = vector.load %arg5[%c0_12, %c0_13] : memref<16x128xf32, #tpu.memory_space<vmem>>, vector<16x128xf32>
    tpu.vector_store %arg5[%c0_12, %c0_13], %32 {strides = array<i32>} : memref<16x128xf32, #tpu.memory_space<vmem>>, vector<16x128xf32>,
    return
  }
  func.func @transform_0(%arg0: i32) -> (i32, i32) {
    %c0_i32 = arith.constant 0 : i32
    %c0_i32_0 = arith.constant 0 : i32
    return %arg0, %c0_i32 : i32, i32
  }
  func.func @transform_1(%arg0: i32) -> (i32, i32) {
    %c0_i32 = arith.constant 0 : i32
    %c0_i32_0 = arith.constant 0 : i32
    %c0_i32_1 = arith.constant 0 : i32
    return %c0_i32, %c0_i32_0 : i32, i32
  }
  func.func @transform_2(%arg0: i32) -> (i32, i32) {
    %c0_i32 = arith.constant 0 : i32
    %c0_i32_0 = arith.constant 0 : i32
    %c0_i32_1 = arith.constant 0 : i32
    return %c0_i32, %c0_i32_0 : i32, i32
  }
  func.func @transform_3(%arg0: i32) -> (i32, i32) {
    %c0_i32 = arith.constant 0 : i32
    %c0_i32_0 = arith.constant 0 : i32
    return %arg0, %c0_i32 : i32, i32
  }
  func.func @transform_4(%arg0: i32) -> (i32, i32) {
    %c0_i32 = arith.constant 0 : i32
    %c0_i32_0 = arith.constant 0 : i32
    return %arg0, %c0_i32 : i32, i32
  }
}

</mosaic_0001>

<llo_original>
// kernel: tpu_custom_call.1
$region0: #{tpu_custom_call.1}
  #allocation0 [shape = 'u32[]', space=smem, size = 0x4, offset = 0x4, fixed_abs, tag = 'smem constant byte address 0x4 - core index']
  #allocation1 [shape = 'u32[144,128]{1,0:T(1,128)}', space=vmem, size = 0x12000, scoped, tag = 'internal scratch']
  %s0 = inlined_call_operand.hbm [shape: f32[16,256], index: 0, kind: input, shape index: {}]
  %s1 = inlined_call_operand.hbm [shape: f32[256,128], index: 1, kind: input, shape index: {}]
  %s2 = inlined_call_operand.vmem [shape: f32[3,128], index: 2, kind: input, shape index: {}]
  %s3 = inlined_call_operand.hbm [shape: f32[16,128], index: 3, kind: input, shape index: {}]
  %s4 = inlined_call_operand.hbm [shape: f32[16,128], index: 4, kind: output, shape index: {}]
  %s5 = sld [smem:[#allocation0]]
  $region38: #{tpu_custom_call.1} parent=0
    _
  %s7 = ssub.s32 1, %s5
  %s8 = scalar_select 0, %s7, %s5
  $region1: #{tpu_custom_call.1} parent=0
    #allocation2 [shape = 'u8[16384]{0}', space=vmem, size = 0x4000, scoped, tag = 'input window, operand 0, single buffered']
    #allocation3 [shape = 's32[1]{0}', space=sflag, size = 0x4, scoped, tag = 'scoped memory for tpu_custom_call.1']
    #allocation4 [shape = 's32[1]{0}', space=sflag, size = 0x4, scoped, tag = 'scoped memory for tpu_custom_call.1']
    #allocation5 [shape = 'u8[131072]{0}', space=vmem, size = 0x20000, scoped, tag = 'input window, operand 1, single buffered']
    #allocation6 [shape = 's32[1]{0}', space=sflag, size = 0x4, scoped, tag = 'scoped memory for tpu_custom_call.1']
    #allocation7 [shape = 'u8[8192]{0}', space=vmem, size = 0x2000, scoped, tag = 'input window, operand 3, single buffered']
    #allocation8 [shape = 'u8[8192]{0}', space=vmem, size = 0x2000, scoped, tag = 'output window, operand 0, single buffered']
    %9 = vsyncpa [#allocation3], 0
    %10 = vsyncpa [#allocation6], 0
    %11 = vsyncpa [#allocation4], 0
    // Predicated region
    $region2: #{tpu_custom_call.1} parent=1 // pred_check
      _
    $region3: #{tpu_custom_call.1} parent=1 // pred_check_branch
      %13 = sbr.rel (0) target = $region5
    $region4: #{tpu_custom_call.1} parent=1 // pred_region
      %s15 = ssub.s32 512, 512
      %16 = vsyncadd [#allocation3], %s15
      %s17 = sshll.u32 [#allocation2], 4
      %s18 = int_to_ptr.vmem [resolvable:$true] %s17
      %23 = dma.hbm_to_vmem [thread:$0]  %s0, 512, %s18, [#allocation3], 256, 256, 16
    $region5: #{tpu_custom_call.1} parent=1 // pred_fallthru
      _
    // Predicated region
    $region6: #{tpu_custom_call.1} parent=1 // pred_check
      _
    $region7: #{tpu_custom_call.1} parent=1 // pred_check_branch
      %25 = sbr.rel (0) target = $region9
    $region8: #{tpu_custom_call.1} parent=1 // pred_region
      %s27 = ssub.s32 4096, 4096
      %28 = vsyncadd [#allocation6], %s27
      %s29 = sshll.u32 [#allocation5], 4
      %s30 = int_to_ptr.vmem [resolvable:$true] %s29
      %35 = dma.hbm_to_vmem [thread:$0]  %s1, 4096, %s30, [#allocation6], 128, 128, 8
    $region9: #{tpu_custom_call.1} parent=1 // pred_fallthru
      _
    // Predicated region
    $region10: #{tpu_custom_call.1} parent=1 // pred_check
      _
    $region11: #{tpu_custom_call.1} parent=1 // pred_check_branch
      %37 = sbr.rel (0) target = $region13
    $region12: #{tpu_custom_call.1} parent=1 // pred_region
      _
    $region13: #{tpu_custom_call.1} parent=1 // pred_fallthru
      _
    // Predicated region
    $region14: #{tpu_custom_call.1} parent=1 // pred_check
      _
    $region15: #{tpu_custom_call.1} parent=1 // pred_check_branch
      %39 = sbr.rel (0) target = $region17
    $region16: #{tpu_custom_call.1} parent=1 // pred_region
      %s41 = ssub.s32 256, 256
      %42 = vsyncadd [#allocation6], %s41
      %s43 = sshll.u32 [#allocation7], 4
      %s44 = int_to_ptr.vmem [resolvable:$true] %s43
      %49 = dma.hbm_to_vmem [thread:$0]  %s3, 256, %s44, [#allocation6], 128, 128, 8
    $region17: #{tpu_custom_call.1} parent=1 // pred_fallthru
      _
    // Predicated region
    $region18: #{tpu_custom_call.1} parent=1 // pred_check
      _
    $region19: #{tpu_custom_call.1} parent=1 // pred_check_branch
      %51 = sbr.rel (0) target = $region21
    $region20: #{tpu_custom_call.1} parent=1 // pred_region
      %52 = dma.done [#allocation3], 512
    $region21: #{tpu_custom_call.1} parent=1 // pred_fallthru
      _
    // Predicated region
    $region22: #{tpu_custom_call.1} parent=1 // pred_check
      _
    $region23: #{tpu_custom_call.1} parent=1 // pred_check_branch
      %54 = sbr.rel (0) target = $region25
    $region24: #{tpu_custom_call.1} parent=1 // pred_region
      %55 = dma.done [#allocation6], 4096
    $region25: #{tpu_custom_call.1} parent=1 // pred_fallthru
      _
    // Predicated region
    $region26: #{tpu_custom_call.1} parent=1 // pred_check
      _
    $region27: #{tpu_custom_call.1} parent=1 // pred_check_branch
      %57 = sbr.rel (0) target = $region29
    $region28: #{tpu_custom_call.1} parent=1 // pred_region
      %58 = dma.done [#allocation6], 256
    $region29: #{tpu_custom_call.1} parent=1 // pred_fallthru
      _
    %v59 = vld [vmem:[#allocation5] sm:$0xff]
    %v60 = vld [vmem:[#allocation5 + $0x8] sm:$0xff]
    %v61 = vld [vmem:[#allocation5 + $0x10] sm:$0xff]
    %v62 = vld [vmem:[#allocation5 + $0x18] sm:$0xff]
    %v63 = vld [vmem:[#allocation5 + $0x20] sm:$0xff]
    %v64 = vld [vmem:[#allocation5 + $0x28] sm:$0xff]
    %v65 = vld [vmem:[#allocation5 + $0x30] sm:$0xff]
    %v66 = vld [vmem:[#allocation5 + $0x38] sm:$0xff]
    %v67 = vld [vmem:[#allocation5 + $0x40] sm:$0xff]
    %v68 = vld [vmem:[#allocation5 + $0x48] sm:$0xff]
    %v69 = vld [vmem:[#allocation5 + $0x50] sm:$0xff]
    %v70 = vld [vmem:[#allocation5 + $0x58] sm:$0xff]
    %v71 = vld [vmem:[#allocation5 + $0x60] sm:$0xff]
    %v72 = vld [vmem:[#allocation5 + $0x68] sm:$0xff]
    %v73 = vld [vmem:[#allocation5 + $0x70] sm:$0xff]
    %v74 = vld [vmem:[#allocation5 + $0x78] sm:$0xff]
    %v75 = vld [vmem:[#allocation5 + $0x80] sm:$0xff]
    %v76 = vld [vmem:[#allocation5 + $0x88] sm:$0xff]
    %v77 = vld [vmem:[#allocation5 + $0x90] sm:$0xff]
    %v78 = vld [vmem:[#allocation5 + $0x98] sm:$0xff]
    %v79 = vld [vmem:[#allocation5 + $0xa0] sm:$0xff]
    %v80 = vld [vmem:[#allocation5 + $0xa8] sm:$0xff]
    %v81 = vld [vmem:[#allocation5 + $0xb0] sm:$0xff]
    %v82 = vld [vmem:[#allocation5 + $0xb8] sm:$0xff]
    %v83 = vld [vmem:[#allocation5 + $0xc0] sm:$0xff]
    %v84 = vld [vmem:[#allocation5 + $0xc8] sm:$0xff]
    %v85 = vld [vmem:[#allocation5 + $0xd0] sm:$0xff]
    %v86 = vld [vmem:[#allocation5 + $0xd8] sm:$0xff]
    %v87 = vld [vmem:[#allocation5 + $0xe0] sm:$0xff]
    %v88 = vld [vmem:[#allocation5 + $0xe8] sm:$0xff]
    %v89 = vld [vmem:[#allocation5 + $0xf0] sm:$0xff]
    %v90 = vld [vmem:[#allocation5 + $0xf8] sm:$0xff]
    %v91 = vld [vmem:[#allocation2] sm:$0xff]
    %v92 = vld [vmem:[#allocation2 + $0x8] sm:$0xff]
    %v93 = vld [vmem:[#allocation2 + $0x10] sm:$0xff]
    %v94 = vld [vmem:[#allocation2 + $0x18] sm:$0xff]
    %v95 = vld [vmem:[%s2] sm:$0x7]
    %v96 = vld [vmem:[#allocation7] sm:$0xff]
    %v97 = vld [vmem:[#allocation7 + $0x8] sm:$0xff]
    %v98 = vlaneseq
    %v99 = vshrl.u32 %v98, 7
    %v100 = vsub.s32 0, %v99
    %v101 = vrot.slane %v95, %v100
    %v102 = vadd.f32 %v96, %v101
    %v103 = vadd.f32 %v97, %v101
    %104 = vmatprep.subr.mxu0 0.0
    %105 = vmatpush1.msra.mxu0 %v59
    %106 = vmatprep.subr.mxu0 0.0
    %107 = vmatpush1.msra.mxu0 %v60
    %108 = vmatprep.subr.mxu0 0.0
    %109 = vmatpush1.msra.mxu0 %v61
    %110 = vmatprep.subr.mxu0 0.0
    %111 = vmatpush1.msra.mxu0 %v62
    %112 = vmatprep.subr.mxu0 0.0
    %113 = vmatpush1.msra.mxu0 %v63
    %114 = vmatprep.subr.mxu0 0.0
    %115 = vmatpush1.msra.mxu0 %v64
    %116 = vmatprep.subr.mxu0 0.0
    %117 = vmatpush1.msra.mxu0 %v65
    %118 = vmatprep.subr.mxu0 0.0
    %119 = vmatpush1.msra.mxu0 %v66
    %120 = vmatprep.subr.mxu0 0.0
    %121 = vmatpush1.msra.mxu0 %v67
    %122 = vmatprep.subr.mxu0 0.0
    %123 = vmatpush1.msra.mxu0 %v68
    %124 = vmatprep.subr.mxu0 0.0
    %125 = vmatpush1.msra.mxu0 %v69
    %126 = vmatprep.subr.mxu0 0.0
    %127 = vmatpush1.msra.mxu0 %v70
    %128 = vmatprep.subr.mxu0 0.0
    %129 = vmatpush1.msra.mxu0 %v71
    %130 = vmatprep.subr.mxu0 0.0
    %131 = vmatpush1.msra.mxu0 %v72
    %132 = vmatprep.subr.mxu0 0.0
    %133 = vmatpush1.msra.mxu0 %v73
    %134 = vmatprep.subr.mxu0 0.0
    %135 = vmatpush1.msra.mxu0 %v74
    %136 = vmatprep.subr.mxu0 0.0
    %137 = vmatpush1.msra.mxu0 %v75
    %138 = vmatprep.subr.mxu0 0.0
    %139 = vmatpush1.msra.mxu0 %v76
    %140 = vmatprep.subr.mxu0 0.0
    %141 = vmatpush1.msra.mxu0 %v77
    %142 = vmatprep.subr.mxu0 0.0
    %143 = vmatpush1.msra.mxu0 %v78
    %144 = vmatprep.subr.mxu0 0.0
    %145 = vmatpush1.msra.mxu0 %v79
    %146 = vmatprep.subr.mxu0 0.0
    %147 = vmatpush1.msra.mxu0 %v80
    %148 = vmatprep.subr.mxu0 0.0
    %149 = vmatpush1.msra.mxu0 %v81
    %150 = vmatprep.subr.mxu0 0.0
    %151 = vmatpush1.msra.mxu0 %v82
    %152 = vmatprep.subr.mxu0 0.0
    %153 = vmatpush1.msra.mxu0 %v83
    %154 = vmatprep.subr.mxu0 0.0
    %155 = vmatpush1.msra.mxu0 %v84
    %156 = vmatprep.subr.mxu0 0.0
    %157 = vmatpush1.msra.mxu0 %v85
    %158 = vmatprep.subr.mxu0 0.0
    %159 = vmatpush1.msra.mxu0 %v86
    %160 = vmatprep.subr.mxu0 0.0
    %161 = vmatpush1.msra.mxu0 %v87
    %162 = vmatprep.subr.mxu0 0.0
    %163 = vmatpush1.msra.mxu0 %v88
    %164 = vmatprep.subr.mxu0 0.0
    %165 = vmatpush1.msra.mxu0 %v89
    %166 = vmatprep.subr.mxu0 0.0
    %167 = vmatpush1.msra.mxu0 %v90
    %168 = vmatprep.mubr.f32.mxu0 %v92
    %169 = vmatmul.mubr.f32.gmra.mrb[0].mxu0 %v91
    %v170 = vpop.f32.mrb[0].mxu0
    %v171 = vadd.f32 %v102, %v170
    %v172 = vpop.f32.mrb[0].mxu0
    %173 = vmatprep.mubr.f32.mxu0 %v94
    %174 = vmatmul.mubr.f32.gmra.mrb[0].mxu0 %v93
    %v175 = vpop.f32.mrb[0].mxu0
    %v176 = vadd.f32 %v103, %v175
    %v177 = vpop.f32.mrb[0].mxu0
    %178 = vdwg.mxu0
    %179 = vadd.xlane.f32.xlu0 %v171
    %v180 = vpop.xlane.xlu0 %179
    %181 = vadd.xlane.f32.xlu0 %v176
    %v182 = vpop.xlane.xlu0 %181
    %v183 = vrcp.pop 128.0
    %v184 = vmul.f32 %v180, %v183
    %v185 = vmul.f32 %v182, %v183
    %v186 = vmul.f32 %v171, %v171
    %v187 = vmul.f32 %v176, %v176
    %188 = vadd.xlane.f32.xlu0 %v186
    %v189 = vpop.xlane.xlu0 %188
    %190 = vadd.xlane.f32.xlu0 %v187
    %v191 = vpop.xlane.xlu0 %190
    %v192 = vmul.f32 %v189, %v183
    %v193 = vmul.f32 %v191, %v183
    %v194 = vmul.f32 %v184, %v184
    %v195 = vmul.f32 %v185, %v185
    %v196 = vsub.f32 %v192, %v194
    %v197 = vsub.f32 %v193, %v195
    %v198 = vadd.f32 %v196, 1e-12
    %v199 = vadd.f32 %v197, 1e-12
    %v200 = vrsqrt.pop %v198
    %v201 = vrsqrt.pop %v199
    %v202 = vsub.f32 %v171, %v184
    %v203 = vsub.f32 %v176, %v185
    %v204 = vlaneseq
    %v205 = vshrl.u32 %v204, 7
    %v206 = vsub.s32 1, %v205
    %v207 = vrot.slane %v95, %v206
    %v208 = vmul.f32 %v200, %v207
    %v209 = vmul.f32 %v201, %v207
    %v210 = vmul.f32 %v202, %v208
    %v211 = vmul.f32 %v203, %v209
    %v212 = vlaneseq
    %v213 = vshrl.u32 %v212, 7
    %v214 = vsub.s32 2, %v213
    %v215 = vrot.slane %v95, %v214
    %v216 = vadd.f32 %v210, %v215
    %v217 = vadd.f32 %v211, %v215
    %218 = vst [vmem:[#allocation8] sm:$0xff] %v216
    %219 = vst [vmem:[#allocation8 + $0x8] sm:$0xff] %v217
    // Predicated region
    $region30: #{tpu_custom_call.1} parent=1 // pred_check
      _
    $region31: #{tpu_custom_call.1} parent=1 // pred_check_branch
      %221 = sbr.rel (0) target = $region33
    $region32: #{tpu_custom_call.1} parent=1 // pred_region
      %s223 = ssub.s32 256, 256
      %224 = vsyncadd [#allocation4], %s223
      %s225 = sshll.u32 [#allocation8], 4
      %s226 = int_to_ptr.vmem [resolvable:$true] %s225
      %231 = dma.vmem_to_hbm [thread:$0]  %s226, 256, %s4, [#allocation4], 128, 128, 8
    $region33: #{tpu_custom_call.1} parent=1 // pred_fallthru
      _
    // Predicated region
    $region34: #{tpu_custom_call.1} parent=1 // pred_check
      _
    $region35: #{tpu_custom_call.1} parent=1 // pred_check_branch
      %233 = sbr.rel (0) target = $region37
    $region36: #{tpu_custom_call.1} parent=1 // pred_region
      %234 = dma.done [#allocation4], 256
    $region37: #{tpu_custom_call.1} parent=1 // pred_fallthru
      _
    %235 = vsyncpa [#allocation3], 1
    %236 = vsyncpa [#allocation6], 1
    %237 = vsyncpa [#allocation4], 1

</llo_original>
